<compile_context>
chip_gen: v6e
topology: v6e:2x2x1
jax: 0.10.0
libtpu: 0.0.40
codegen_flags: <defaults>
</compile_context>

<pallas_src>
import jax
import jax.numpy as jnp
from jax.experimental import pallas as pl
from jax.experimental.pallas import tpu as pltpu


# ---------------------------------------------------------------------------
# Kernel
# ---------------------------------------------------------------------------
def _ffn_kernel(x_ref, w1_ref, b1_ref, w2_ref, b2_ref, o_ref, acc_ref):
    """One (row-tile, d_hid-tile) grid step of  out = relu(x@W1+b1)@W2 + b2 + x.

    Grid = (rows, k); k is the d_hid reduction axis (innermost, 'arbitrary').
    acc_ref is an f32 (tm, d_in) accumulator that persists across the k axis.
    """
    k = pl.program_id(1)
    nk = pl.num_programs(1)

    @pl.when(k == 0)
    def _():
        acc_ref[...] = jnp.zeros_like(acc_ref)

    x = x_ref[...]
    # Feed the MXU in the weights' native dtype: bf16 weights -> bf16xbf16
    # matmuls with f32 accumulation (fast path on v5e/v6e/v7x).  No-op for
    # f32 weights.
    x_mxu = x.astype(w1_ref.dtype)

    # First linear (this d_hid slice) + bias + ReLU, in f32.
    h = jnp.dot(x_mxu, w1_ref[...], preferred_element_type=jnp.float32)
    h = jnp.maximum(h + b1_ref[...].astype(jnp.float32), 0.0)

    # Second linear: MXU-native operand dtype, partial sums accumulated in f32.
    acc_ref[...] += jnp.dot(h.astype(w2_ref.dtype), w2_ref[...],
                            preferred_element_type=jnp.float32)

    @pl.when(k == nk - 1)
    def _():
        y = acc_ref[...] + b2_ref[...].astype(jnp.float32)
        # Dropout is identity at inference; residual add fused here.
        # TODO(synk): training-mode dropout mask via pltpu.prng_random_bits.
        o_ref[...] = (y + x.astype(jnp.float32)).astype(o_ref.dtype)


# ---------------------------------------------------------------------------
# Tiling / VMEM budgeting
# ---------------------------------------------------------------------------
def _round_up(n, m):
    return ((n + m - 1) // m) * m


def _vmem_budget():
    try:
        vmem_cap = int(pltpu.get_tpu_info().vmem_capacity_bytes)
    except Exception:
        vmem_cap = 64 << 20  # conservative: v7x has 64 MiB per TensorCore
    # Generation-aware limit: ~90% of physical, never above 120 MiB (on
    # 128-MiB v5e/v6e a flat 100-MiB clamp became the binding constraint).
    vmem_limit = min(int(vmem_cap * 0.9), 120 << 20)
    return vmem_cap, vmem_limit


def _tk_candidates(d_hid):
    """d_hid tile sizes.  They must divide d_hid exactly (garbage in a padded
    hidden column would pass through ReLU into the accumulator) and be
    lane-dense (multiple of 128), or be d_hid itself."""
    cands = [d_hid]
    for c in (2048, 1024, 512, 256, 128):
        if c < d_hid and d_hid % c == 0:
            cands.append(c)
    return cands


def _pick_tiles(M, d_in, d_hid, x_dtype, w_dtype, out_dtype, allow_single_buffer):
    """Largest (tm, tk) whose working set fits the VMEM budget.

    Weights are counted double-buffered whenever they stream along k (nk > 1)
    or when single-buffering has been rejected by the compiler."""
    _, vmem_limit = _vmem_budget()
    budget = max(vmem_limit - (6 << 20), 8 << 20)  # compiler-internal headroom

    xb = jnp.dtype(x_dtype).itemsize
    wb = jnp.dtype(w_dtype).itemsize
    ob = jnp.dtype(out_dtype).itemsize

    tk_cands = _tk_candidates(d_hid)
    # Prefer row tiles that are multiples of 256 (v6e/v7x MXU is 2x256x256);
    # only drop below 256 when VMEM forces it.
    tm_cands = (512, 256, 128, 64, 32, 16, 8)

    for tm in tm_cands:
        for tk in tk_cands:
            nk = d_hid // tk
            w_bufs = 1 if (nk == 1 and allow_single_buffer) else 2
            weights = w_bufs * (2 * d_in * tk + tk + d_in) * wb  # W1, W2, b1, b2 tiles
            working = (2 * tm * d_in * xb      # double-buffered x tile
                       + 2 * tm * d_in * ob    # double-buffered out tile
                       + tm * tk * 4           # f32 hidden activation h
                       + tm * tk * wb          # cast copy of h (MXU operand)
                       + 2 * tm * d_in * 4)    # f32 accumulator + y temporary
            if weights + working <= budget:
                return tm, tk, vmem_limit
    return 8, tk_cands[-1], vmem_limit


def _num_tensorcores_per_chip():
    """Best-effort 2-TC (v7x megacore) detection; defaults to 1."""
    try:
        info = pltpu.get_tpu_info()
        for attr in ("num_cores", "core_count", "cores_per_chip", "num_tensorcores"):
            v = getattr(info, attr, None)
            if isinstance(v, int) and v > 0:
                return v
    except Exception:
        pass
    return 1


# ---------------------------------------------------------------------------
# pallas_call builder + public wrapper
# ---------------------------------------------------------------------------
def _build_call(M, d_in, d_hid, x_dtype, w_dtype, tm, tk, vmem_limit,
                single_buffer_weights):
    nk = d_hid // tk
    n_rows = pl.cdiv(M, tm)
    xb = jnp.dtype(x_dtype).itemsize
    wb = jnp.dtype(w_dtype).itemsize

    # For small-M / weight-dominated (decode-like) calls, don't shard the row
    # axis across TensorCores: 'parallel' would duplicate the resident weights
    # (VMEM footprint + HBM traffic) per TC in the weight-bound regime.
    weight_bytes = (2 * d_in * d_hid + d_in + d_hid) * wb
    act_bytes = 2 * M * d_in * xb
    row_sem = "arbitrary" if weight_bytes > 4 * act_bytes else "parallel"

    # Weights are re-fetched once per row block whenever they stream along k.
    weight_reads = weight_bytes * (1 if nk == 1 else n_rows)
    cost = pl.CostEstimate(
        flops=4 * M * d_in * d_hid,
        transcendentals=0,
        bytes_accessed=(M * d_in * xb          # read x
                        + M * d_in * xb        # write out
                        + weight_reads),
    )

    # Constant-index-map weights (nk == 1) don't need double buffering.
    wk = dict(pipeline_mode=pl.Buffered(1)) if (single_buffer_weights and nk == 1) else {}

    return pl.pallas_call(
        _ffn_kernel,
        out_shape=jax.ShapeDtypeStruct((M, d_in), x_dtype),
        grid_spec=pltpu.PrefetchScalarGridSpec(
            num_scalar_prefetch=0,
            grid=(n_rows, nk),
            in_specs=[
                pl.BlockSpec((tm, d_in), lambda i, k: (i, 0)),        # x row tile
                pl.BlockSpec((d_in, tk), lambda i, k: (0, k), **wk),  # W1 slice
                pl.BlockSpec((1, tk), lambda i, k: (0, k), **wk),     # b1 slice
                pl.BlockSpec((tk, d_in), lambda i, k: (k, 0), **wk),  # W2 slice
                pl.BlockSpec((1, d_in), lambda i, k: (0, 0), **wk),   # b2
            ],
            out_specs=pl.BlockSpec((tm, d_in), lambda i, k: (i, 0)),
            scratch_shapes=[pltpu.VMEM((tm, d_in), jnp.float32)],     # f32 accumulator
        ),
        compiler_params=pltpu.CompilerParams(
            dimension_semantics=(row_sem, "arbitrary"),
            vmem_limit_bytes=vmem_limit,
        ),
        cost_estimate=cost,
    )


def positionwise_ffn(x, w1, b1, w2, b2, *, tm=None, tk=None):
    """PositionwiseFeedForward forward pass (eval mode).

    x: (batch, seq, d_in); w1: (d_in, d_hid) (= W1.T); b1: (d_hid,);
    w2: (d_hid, d_in) (= W2.T); b2: (d_in,).  Returns (batch, seq, d_in)."""
    batch, seq, d_in = x.shape
    d_hid = w1.shape[1]
    assert w1.shape == (d_in, d_hid) and w2.shape == (d_hid, d_in)
    assert b1.shape == (d_hid,) and b2.shape == (d_in,)
    M = batch * seq

    auto_tm, auto_tk, vmem_limit = _pick_tiles(
        M, d_in, d_hid, x.dtype, w1.dtype, x.dtype, allow_single_buffer=True)
    tm_ = auto_tm if tm is None else tm
    tk_ = auto_tk if tk is None else tk
    assert d_hid % tk_ == 0, "tk must divide d_hid exactly"

    # Don't over-tile tiny inputs; keep tm a multiple of 8 for (8,128) tiling.
    tm_ = max(8, min(tm_, _round_up(M, 8)))
    # Force >= 2 row blocks only on 2-TensorCore chips (v7x megacore); on
    # single-TC v5e/v6e this would just shrink the tile for no gain.
    if _num_tensorcores_per_chip() >= 2 and M > 8 and pl.cdiv(M, tm_) < 2:
        tm_ = max(8, _round_up(pl.cdiv(M, 2), 8))

    # No host-side pad/slice: grid uses cdiv, Pallas masks the partial last
    # row block (garbage rows stay row-local and are discarded on store).
    x2d = x.reshape(M, d_in)
    b1_2d = b1.reshape(1, d_hid)
    b2_2d = b2.reshape(1, d_in)

    try:
        out = _build_call(M, d_in, d_hid, x.dtype, w1.dtype, tm_, tk_,
                          vmem_limit, single_buffer_weights=True)(
            x2d, w1, b1_2d, w2, b2_2d)
    except Exception:
        # This Pallas build rejected pl.Buffered(1): re-budget the tiles with
        # the weights counted double-buffered (so the fallback cannot blow the
        # 64-MiB v7x budget) and rebuild with default buffering.
        tm2, tk2, vmem_limit = _pick_tiles(
            M, d_in, d_hid, x.dtype, w1.dtype, x.dtype, allow_single_buffer=False)
        tm2 = tm2 if tm is None else tm
        tk2 = tk2 if tk is None else tk
        assert d_hid % tk2 == 0
        tm2 = max(8, min(tm2, _round_up(M, 8)))
        out = _build_call(M, d_in, d_hid, x.dtype, w1.dtype, tm2, tk2,
                          vmem_limit, single_buffer_weights=False)(
            x2d, w1, b1_2d, w2, b2_2d)

    return out.reshape(batch, seq, d_in)


def init_params(key, d_in, d_hid, dtype=jnp.bfloat16):
    """nn.Linear-style init (U[-1/sqrt(fan_in), 1/sqrt(fan_in)]).  Weights are
    returned pre-transposed for row-major matmul.  bf16 weights (default) are
    the fast MXU-native path on v5e/v6e/v7x and halve resident-weight VMEM."""
    k1, k2, k3, k4 = jax.random.split(key, 4)
    bound1 = 1.0 / (d_in ** 0.5)
    bound2 = 1.0 / (d_hid ** 0.5)
    w1 = jax.random.uniform(k1, (d_in, d_hid), jnp.float32, -bound1, bound1).astype(dtype)
    b1 = jax.random.uniform(k2, (d_hid,), jnp.float32, -bound1, bound1).astype(dtype)
    w2 = jax.random.uniform(k3, (d_hid, d_in), jnp.float32, -bound2, bound2).astype(dtype)
    b2 = jax.random.uniform(k4, (d_in,), jnp.float32, -bound2, bound2).astype(dtype)
    return w1, b1, w2, b2


if __name__ == "__main__":
    key = jax.random.PRNGKey(0)
    kx, kp = jax.random.split(key)

    # Small but lane-dense demo shapes (feature dims are multiples of 128).
    batch, seq, d_in, d_hid = 2, 8, 128, 256
    x = jax.random.normal(kx, (batch, seq, d_in), jnp.float32)

    # 1) f32 weights: tight check against a pure-JAX reference (eval-mode
    #    dropout = identity).
    w1, b1, w2, b2 = init_params(kp, d_in, d_hid, dtype=jnp.float32)
    out = jax.block_until_ready(positionwise_ffn(x, w1, b1, w2, b2))
    ref = jnp.maximum(x @ w1 + b1, 0.0) @ w2 + b2 + x
    assert out.shape == x.shape
    err = float(jnp.max(jnp.abs(out - ref)))
    assert jnp.allclose(out, ref, atol=1e-3, rtol=1e-3), f"f32 max abs err {err}"

    # 2) bf16 weights (production path: bf16 MXU operands, f32 accumulation);
    #    looser tolerance because x/h are rounded to bf16 in-kernel.
    w1b, b1b, w2b, b2b = init_params(kp, d_in, d_hid, dtype=jnp.bfloat16)
    out_b = jax.block_until_ready(positionwise_ffn(x, w1b, b1b, w2b, b2b))
    ref_b = (jnp.maximum(x @ w1b.astype(jnp.float32) + b1b.astype(jnp.float32), 0.0)
             @ w2b.astype(jnp.float32) + b2b.astype(jnp.float32) + x)
    err_b = float(jnp.max(jnp.abs(out_b - ref_b)))
    assert jnp.allclose(out_b, ref_b, atol=1e-1, rtol=5e-2), f"bf16 max abs err {err_b}"

    print("KERNEL_OK")
</pallas_src>

<mosaic_0001>
module attributes {stable_mosaic.version = 11 : i64} {
  func.func @_ffn_kernel(%arg0: i32, %arg1: i32, %arg2: memref<16x128xf32, #tpu.memory_space<vmem>>, %arg3: memref<128x256xf32, #tpu.memory_space<vmem>>, %arg4: memref<1x256xf32, #tpu.memory_space<vmem>>, %arg5: memref<256x128xf32, #tpu.memory_space<vmem>>, %arg6: memref<1x128xf32, #tpu.memory_space<vmem>>, %arg7: memref<16x128xf32, #tpu.memory_space<vmem>>, %arg8: memref<16x128xf32, #tpu.memory_space<vmem>>) attributes {dimension_semantics = [#tpu.dimension_semantics<arbitrary>, #tpu.dimension_semantics<arbitrary>], iteration_bounds = array<i64: 1, 1>, scalar_prefetch = 0 : i64, scratch_operands = 1 : i64, tpu.core_type = #tpu.core_type<tc>, window_params = [{transform_indices = @transform_0, window_bounds = array<i64: 16, 128>}, {pipeline_mode = #tpu.pipeline_mode<synchronous>, transform_indices = @transform_1, window_bounds = array<i64: 128, 256>}, {pipeline_mode = #tpu.pipeline_mode<synchronous>, transform_indices = @transform_2, window_bounds = array<i64: 1, 256>}, {pipeline_mode = #tpu.pipeline_mode<synchronous>, transform_indices = @transform_3, window_bounds = array<i64: 256, 128>}, {pipeline_mode = #tpu.pipeline_mode<synchronous>, transform_indices = @transform_4, window_bounds = array<i64: 1, 128>}, {transform_indices = @transform_5, window_bounds = array<i64: 16, 128>}]} {
    %c0_i32 = arith.constant 0 : i32
    %0 = arith.cmpi eq, %arg1, %c0_i32 : i32
    %1 = arith.extui %0 : i1 to i32
    %c0_i32_0 = arith.constant 0 : i32
    %2 = arith.cmpi ne, %1, %c0_i32_0 : i32
    scf.if %2 {
      %cst_16 = arith.constant 0.000000e+00 : f32
      %19 = vector.broadcast %cst_16 : f32 to vector<16x128xf32>
      %c0_17 = arith.constant 0 : index
      %c0_18 = arith.constant 0 : index
      %20 = vector.load %arg8[%c0_17, %c0_18] : memref<16x128xf32, #tpu.memory_space<vmem>>, vector<16x128xf32>
      tpu.vector_store %arg8[%c0_17, %c0_18], %19 {strides = array<i32>} : memref<16x128xf32, #tpu.memory_space<vmem>>, vector<16x128xf32>,
    } else {
    }
    %c0 = arith.constant 0 : index
    %c0_1 = arith.constant 0 : index
    %3 = vector.load %arg2[%c0, %c0_1] : memref<16x128xf32, #tpu.memory_space<vmem>>, vector<16x128xf32>
    %c0_2 = arith.constant 0 : index
    %c0_3 = arith.constant 0 : index
    %4 = vector.load %arg3[%c0_2, %c0_3] : memref<128x256xf32, #tpu.memory_space<vmem>>, vector<128x256xf32>
    %cst = arith.constant dense<0.000000e+00> : vector<16x256xf32>
    %5 = tpu.matmul %3, %4, %cst {dimension_numbers = #tpu.dot_dimension_numbers<[1], [0], [0], [1], [0, 0, 1, 1], [], []>} : vector<16x128xf32>, vector<128x256xf32>, vector<16x256xf32> -> vector<16x256xf32>
    %c0_4 = arith.constant 0 : index
    %c0_5 = arith.constant 0 : index
    %6 = vector.load %arg4[%c0_4, %c0_5] : memref<1x256xf32, #tpu.memory_space<vmem>>, vector<1x256xf32>
    %7 = vector.broadcast %6 : vector<1x256xf32> to vector<16x256xf32>
    %8 = arith.addf %5, %7 : vector<16x256xf32>
    %cst_6 = arith.constant 0.000000e+00 : f32
    %9 = vector.broadcast %cst_6 : f32 to vector<16x256xf32>
    %10 = arith.maximumf %8, %9 : vector<16x256xf32>
    %c0_7 = arith.constant 0 : index
    %c0_8 = arith.constant 0 : index
    %11 = vector.load %arg8[%c0_7, %c0_8] : memref<16x128xf32, #tpu.memory_space<vmem>>, vector<16x128xf32>
    %c0_9 = arith.constant 0 : index
    %c0_10 = arith.constant 0 : index
    %12 = vector.load %arg5[%c0_9, %c0_10] : memref<256x128xf32, #tpu.memory_space<vmem>>, vector<256x128xf32>
    %cst_11 = arith.constant dense<0.000000e+00> : vector<16x128xf32>
    %13 = tpu.matmul %10, %12, %cst_11 {dimension_numbers = #tpu.dot_dimension_numbers<[1], [0], [0], [1], [0, 0, 1, 1], [], []>} : vector<16x256xf32>, vector<256x128xf32>, vector<16x128xf32> -> vector<16x128xf32>
    %14 = arith.addf %11, %13 : vector<16x128xf32>
    %c0_12 = arith.constant 0 : index
    %c0_13 = arith.constant 0 : index
    %15 = vector.load %arg8[%c0_12, %c0_13] : memref<16x128xf32, #tpu.memory_space<vmem>>, vector<16x128xf32>
    tpu.vector_store %arg8[%c0_12, %c0_13], %14 {strides = array<i32>} : memref<16x128xf32, #tpu.memory_space<vmem>>, vector<16x128xf32>,
    %c0_i32_14 = arith.constant 0 : i32
    %16 = arith.cmpi eq, %arg1, %c0_i32_14 : i32
    %17 = arith.extui %16 : i1 to i32
    %c0_i32_15 = arith.constant 0 : i32
    %18 = arith.cmpi ne, %17, %c0_i32_15 : i32
    scf.if %18 {
      %c0_16 = arith.constant 0 : index
      %c0_17 = arith.constant 0 : index
      %19 = vector.load %arg8[%c0_16, %c0_17] : memref<16x128xf32, #tpu.memory_space<vmem>>, vector<16x128xf32>
      %c0_18 = arith.constant 0 : index
      %c0_19 = arith.constant 0 : index
      %20 = vector.load %arg6[%c0_18, %c0_19] : memref<1x128xf32, #tpu.memory_space<vmem>>, vector<1x128xf32>
      %21 = vector.broadcast %20 : vector<1x128xf32> to vector<16x128xf32>
      %22 = arith.addf %19, %21 : vector<16x128xf32>
      %23 = arith.addf %22, %3 : vector<16x128xf32>
      %c0_20 = arith.constant 0 : index
      %c0_21 = arith.constant 0 : index
      %24 = vector.load %arg7[%c0_20, %c0_21] : memref<16x128xf32, #tpu.memory_space<vmem>>, vector<16x128xf32>
      tpu.vector_store %arg7[%c0_20, %c0_21], %23 {strides = array<i32>} : memref<16x128xf32, #tpu.memory_space<vmem>>, vector<16x128xf32>,
    } else {
    }
    return
  }
  func.func @transform_0(%arg0: i32, %arg1: i32) -> (i32, i32) {
    %c0_i32 = arith.constant 0 : i32
    %c0_i32_0 = arith.constant 0 : i32
    return %arg0, %c0_i32 : i32, i32
  }
  func.func @transform_1(%arg0: i32, %arg1: i32) -> (i32, i32) {
    %c0_i32 = arith.constant 0 : i32
    %c0_i32_0 = arith.constant 0 : i32
    return %c0_i32, %arg1 : i32, i32
  }
  func.func @transform_2(%arg0: i32, %arg1: i32) -> (i32, i32) {
    %c0_i32 = arith.constant 0 : i32
    %c0_i32_0 = arith.constant 0 : i32
    return %c0_i32, %arg1 : i32, i32
  }
  func.func @transform_3(%arg0: i32, %arg1: i32) -> (i32, i32) {
    %c0_i32 = arith.constant 0 : i32
    %c0_i32_0 = arith.constant 0 : i32
    return %arg1, %c0_i32 : i32, i32
  }
  func.func @transform_4(%arg0: i32, %arg1: i32) -> (i32, i32) {
    %c0_i32 = arith.constant 0 : i32
    %c0_i32_0 = arith.constant 0 : i32
    %c0_i32_1 = arith.constant 0 : i32
    return %c0_i32, %c0_i32_0 : i32, i32
  }
  func.func @transform_5(%arg0: i32, %arg1: i32) -> (i32, i32) {
    %c0_i32 = arith.constant 0 : i32
    %c0_i32_0 = arith.constant 0 : i32
    return %arg0, %c0_i32 : i32, i32
  }
}

module attributes {stable_mosaic.version = 11 : i64} {
  func.func @_ffn_kernel(%arg0: i32, %arg1: i32, %arg2: memref<16x128xf32, #tpu.memory_space<vmem>>, %arg3: memref<128x256xf32, #tpu.memory_space<vmem>>, %arg4: memref<1x256xf32, #tpu.memory_space<vmem>>, %arg5: memref<256x128xf32, #tpu.memory_space<vmem>>, %arg6: memref<1x128xf32, #tpu.memory_space<vmem>>, %arg7: memref<16x128xf32, #tpu.memory_space<vmem>>, %arg8: memref<16x128xf32, #tpu.memory_space<vmem>>) attributes {dimension_semantics = [#tpu.dimension_semantics<arbitrary>, #tpu.dimension_semantics<arbitrary>], iteration_bounds = array<i64: 1, 1>, scalar_prefetch = 0 : i64, scratch_operands = 1 : i64, tpu.core_type = #tpu.core_type<tc>, window_params = [{transform_indices = @transform_0, window_bounds = array<i64: 16, 128>}, {transform_indices = @transform_1, window_bounds = array<i64: 128, 256>}, {transform_indices = @transform_2, window_bounds = array<i64: 1, 256>}, {transform_indices = @transform_3, window_bounds = array<i64: 256, 128>}, {pipeline_mode = #tpu.pipeline_mode<synchronous>, transform_indices = @transform_4, window_bounds = array<i64: 1, 128>}, {transform_indices = @transform_5, window_bounds = array<i64: 16, 128>}]} {
    %c0_i32 = arith.constant 0 : i32
    %0 = arith.cmpi eq, %arg1, %c0_i32 : i32
    %1 = arith.extui %0 : i1 to i32
    %c0_i32_0 = arith.constant 0 : i32
    %2 = arith.cmpi ne, %1, %c0_i32_0 : i32
    scf.if %2 {
      %cst_16 = arith.constant 0.000000e+00 : f32
      %19 = vector.broadcast %cst_16 : f32 to vector<16x128xf32>
      %c0_17 = arith.constant 0 : index
      %c0_18 = arith.constant 0 : index
      %20 = vector.load %arg8[%c0_17, %c0_18] : memref<16x128xf32, #tpu.memory_space<vmem>>, vector<16x128xf32>
      tpu.vector_store %arg8[%c0_17, %c0_18], %19 {strides = array<i32>} : memref<16x128xf32, #tpu.memory_space<vmem>>, vector<16x128xf32>,
    } else {
    }
    %c0 = arith.constant 0 : index
    %c0_1 = arith.constant 0 : index
    %3 = vector.load %arg2[%c0, %c0_1] : memref<16x128xf32, #tpu.memory_space<vmem>>, vector<16x128xf32>
    %c0_2 = arith.constant 0 : index
    %c0_3 = arith.constant 0 : index
    %4 = vector.load %arg3[%c0_2, %c0_3] : memref<128x256xf32, #tpu.memory_space<vmem>>, vector<128x256xf32>
    %cst = arith.constant dense<0.000000e+00> : vector<16x256xf32>
    %5 = tpu.matmul %3, %4, %cst {dimension_numbers = #tpu.dot_dimension_numbers<[1], [0], [0], [1], [0, 0, 1, 1], [], []>} : vector<16x128xf32>, vector<128x256xf32>, vector<16x256xf32> -> vector<16x256xf32>
    %c0_4 = arith.constant 0 : index
    %c0_5 = arith.constant 0 : index
    %6 = vector.load %arg4[%c0_4, %c0_5] : memref<1x256xf32, #tpu.memory_space<vmem>>, vector<1x256xf32>
    %7 = vector.broadcast %6 : vector<1x256xf32> to vector<16x256xf32>
    %8 = arith.addf %5, %7 : vector<16x256xf32>
    %cst_6 = arith.constant 0.000000e+00 : f32
    %9 = vector.broadcast %cst_6 : f32 to vector<16x256xf32>
    %10 = arith.maximumf %8, %9 : vector<16x256xf32>
    %c0_7 = arith.constant 0 : index
    %c0_8 = arith.constant 0 : index
    %11 = vector.load %arg8[%c0_7, %c0_8] : memref<16x128xf32, #tpu.memory_space<vmem>>, vector<16x128xf32>
    %c0_9 = arith.constant 0 : index
    %c0_10 = arith.constant 0 : index
    %12 = vector.load %arg5[%c0_9, %c0_10] : memref<256x128xf32, #tpu.memory_space<vmem>>, vector<256x128xf32>
    %cst_11 = arith.constant dense<0.000000e+00> : vector<16x128xf32>
    %13 = tpu.matmul %10, %12, %cst_11 {dimension_numbers = #tpu.dot_dimension_numbers<[1], [0], [0], [1], [0, 0, 1, 1], [], []>} : vector<16x256xf32>, vector<256x128xf32>, vector<16x128xf32> -> vector<16x128xf32>
    %14 = arith.addf %11, %13 : vector<16x128xf32>
    %c0_12 = arith.constant 0 : index
    %c0_13 = arith.constant 0 : index
    %15 = vector.load %arg8[%c0_12, %c0_13] : memref<16x128xf32, #tpu.memory_space<vmem>>, vector<16x128xf32>
    tpu.vector_store %arg8[%c0_12, %c0_13], %14 {strides = array<i32>} : memref<16x128xf32, #tpu.memory_space<vmem>>, vector<16x128xf32>,
    %c0_i32_14 = arith.constant 0 : i32
    %16 = arith.cmpi eq, %arg1, %c0_i32_14 : i32
    %17 = arith.extui %16 : i1 to i32
    %c0_i32_15 = arith.constant 0 : i32
    %18 = arith.cmpi ne, %17, %c0_i32_15 : i32
    scf.if %18 {
      %c0_16 = arith.constant 0 : index
      %c0_17 = arith.constant 0 : index
      %19 = vector.load %arg8[%c0_16, %c0_17] : memref<16x128xf32, #tpu.memory_space<vmem>>, vector<16x128xf32>
      %c0_18 = arith.constant 0 : index
      %c0_19 = arith.constant 0 : index
      %20 = vector.load %arg6[%c0_18, %c0_19] : memref<1x128xf32, #tpu.memory_space<vmem>>, vector<1x128xf32>
      %21 = vector.broadcast %20 : vector<1x128xf32> to vector<16x128xf32>
      %22 = arith.addf %19, %21 : vector<16x128xf32>
      %23 = arith.addf %22, %3 : vector<16x128xf32>
      %c0_20 = arith.constant 0 : index
      %c0_21 = arith.constant 0 : index
      %24 = vector.load %arg7[%c0_20, %c0_21] : memref<16x128xf32, #tpu.memory_space<vmem>>, vector<16x128xf32>
      tpu.vector_store %arg7[%c0_20, %c0_21], %23 {strides = array<i32>} : memref<16x128xf32, #tpu.memory_space<vmem>>, vector<16x128xf32>,
    } else {
    }
    return
  }
  func.func @transform_0(%arg0: i32, %arg1: i32) -> (i32, i32) {
    %c0_i32 = arith.constant 0 : i32
    %c0_i32_0 = arith.constant 0 : i32
    return %arg0, %c0_i32 : i32, i32
  }
  func.func @transform_1(%arg0: i32, %arg1: i32) -> (i32, i32) {
    %c0_i32 = arith.constant 0 : i32
    %c0_i32_0 = arith.constant 0 : i32
    return %c0_i32, %arg1 : i32, i32
  }
  func.func @transform_2(%arg0: i32, %arg1: i32) -> (i32, i32) {
    %c0_i32 = arith.constant 0 : i32
    %c0_i32_0 = arith.constant 0 : i32
    return %c0_i32, %arg1 : i32, i32
  }
  func.func @transform_3(%arg0: i32, %arg1: i32) -> (i32, i32) {
    %c0_i32 = arith.constant 0 : i32
    %c0_i32_0 = arith.constant 0 : i32
    return %arg1, %c0_i32 : i32, i32
  }
  func.func @transform_4(%arg0: i32, %arg1: i32) -> (i32, i32) {
    %c0_i32 = arith.constant 0 : i32
    %c0_i32_0 = arith.constant 0 : i32
    %c0_i32_1 = arith.constant 0 : i32
    return %c0_i32, %c0_i32_0 : i32, i32
  }
  func.func @transform_5(%arg0: i32, %arg1: i32) -> (i32, i32) {
    %c0_i32 = arith.constant 0 : i32
    %c0_i32_0 = arith.constant 0 : i32
    return %arg0, %c0_i32 : i32, i32
  }
}

</mosaic_0001>

<llo_original>
// kernel: tpu_custom_call.1
$region0: #{tpu_custom_call.1}
  #allocation0 [shape = 'u32[]', space=smem, size = 0x4, offset = 0x4, fixed_abs, tag = 'smem constant byte address 0x4 - core index']
  #allocation1 [shape = 'u32[144,128]{1,0:T(1,128)}', space=vmem, size = 0x12000, scoped, tag = 'internal scratch']
  #allocation2 [shape = 'f32[16,128]{1,0:T(8,128)}', space=vmem, size = 0x2000, scoped, tag = 'scratch operand']
  %s0 = inlined_call_operand.hbm [shape: f32[16,128], index: 0, kind: input, shape index: {}]
  %s1 = inlined_call_operand.hbm [shape: f32[128,256], index: 1, kind: input, shape index: {}]
  %s2 = inlined_call_operand.vmem [shape: f32[1,256], index: 2, kind: input, shape index: {}]
  %s3 = inlined_call_operand.hbm [shape: f32[256,128], index: 3, kind: input, shape index: {}]
  %s4 = inlined_call_operand.vmem [shape: f32[1,128], index: 4, kind: input, shape index: {}]
  %s5 = inlined_call_operand.hbm [shape: f32[16,128], index: 5, kind: output, shape index: {}]
  %s6 = sld [smem:[#allocation0]]
  $region50: #{tpu_custom_call.1} parent=0
    _
  %s8 = ssub.s32 1, %s6
  %s9 = scalar_select 0, %s8, %s6
  $region1: #{tpu_custom_call.1} parent=0
    #allocation3 [shape = 'u8[8192]{0}', space=vmem, size = 0x2000, scoped, tag = 'input window, operand 0, single buffered']
    #allocation4 [shape = 's32[1]{0}', space=sflag, size = 0x4, scoped, tag = 'scoped memory for tpu_custom_call.1']
    #allocation5 [shape = 's32[1]{0}', space=sflag, size = 0x4, scoped, tag = 'scoped memory for tpu_custom_call.1']
    #allocation6 [shape = 'u8[131072]{0}', space=vmem, size = 0x20000, scoped, tag = 'input window, operand 1, single buffered']
    #allocation7 [shape = 's32[1]{0}', space=sflag, size = 0x4, scoped, tag = 'scoped memory for tpu_custom_call.1']
    #allocation8 [shape = 'u8[131072]{0}', space=vmem, size = 0x20000, scoped, tag = 'input window, operand 3, single buffered']
    #allocation9 [shape = 'u8[8192]{0}', space=vmem, size = 0x2000, scoped, tag = 'output window, operand 0, single buffered']
    %10 = vsyncpa [#allocation4], 0
    %11 = vsyncpa [#allocation7], 0
    %12 = vsyncpa [#allocation5], 0
    // Predicated region
    $region2: #{tpu_custom_call.1} parent=1 // pred_check
      _
    $region3: #{tpu_custom_call.1} parent=1 // pred_check_branch
      %14 = sbr.rel (0) target = $region5
    $region4: #{tpu_custom_call.1} parent=1 // pred_region
      %s16 = ssub.s32 256, 256
      %17 = vsyncadd [#allocation4], %s16
      %s18 = sshll.u32 [#allocation3], 4
      %s19 = int_to_ptr.vmem [resolvable:$true] %s18
      %24 = dma.hbm_to_vmem [thread:$0]  %s0, 256, %s19, [#allocation4], 128, 128, 8
    $region5: #{tpu_custom_call.1} parent=1 // pred_fallthru
      _
    // Predicated region
    $region6: #{tpu_custom_call.1} parent=1 // pred_check
      _
    $region7: #{tpu_custom_call.1} parent=1 // pred_check_branch
      %26 = sbr.rel (0) target = $region9
    $region8: #{tpu_custom_call.1} parent=1 // pred_region
      %s28 = ssub.s32 4096, 4096
      %29 = vsyncadd [#allocation7], %s28
      %s30 = sshll.u32 [#allocation6], 4
      %s31 = int_to_ptr.vmem [resolvable:$true] %s30
      %36 = dma.hbm_to_vmem [thread:$0]  %s1, 4096, %s31, [#allocation7], 256, 256, 16
    $region9: #{tpu_custom_call.1} parent=1 // pred_fallthru
      _
    // Predicated region
    $region10: #{tpu_custom_call.1} parent=1 // pred_check
      _
    $region11: #{tpu_custom_call.1} parent=1 // pred_check_branch
      %38 = sbr.rel (0) target = $region13
    $region12: #{tpu_custom_call.1} parent=1 // pred_region
      _
    $region13: #{tpu_custom_call.1} parent=1 // pred_fallthru
      _
    // Predicated region
    $region14: #{tpu_custom_call.1} parent=1 // pred_check
      _
    $region15: #{tpu_custom_call.1} parent=1 // pred_check_branch
      %40 = sbr.rel (0) target = $region17
    $region16: #{tpu_custom_call.1} parent=1 // pred_region
      %s42 = ssub.s32 4096, 4096
      %43 = vsyncadd [#allocation7], %s42
      %s44 = sshll.u32 [#allocation8], 4
      %s45 = int_to_ptr.vmem [resolvable:$true] %s44
      %50 = dma.hbm_to_vmem [thread:$0]  %s3, 4096, %s45, [#allocation7], 128, 128, 8
    $region17: #{tpu_custom_call.1} parent=1 // pred_fallthru
      _
    // Predicated region
    $region18: #{tpu_custom_call.1} parent=1 // pred_check
      _
    $region19: #{tpu_custom_call.1} parent=1 // pred_check_branch
      %52 = sbr.rel (0) target = $region21
    $region20: #{tpu_custom_call.1} parent=1 // pred_region
      _
    $region21: #{tpu_custom_call.1} parent=1 // pred_fallthru
      _
    // Predicated region
    $region22: #{tpu_custom_call.1} parent=1 // pred_check
      _
    $region23: #{tpu_custom_call.1} parent=1 // pred_check_branch
      %54 = sbr.rel (0) target = $region25
    $region24: #{tpu_custom_call.1} parent=1 // pred_region
      %55 = dma.done [#allocation4], 256
    $region25: #{tpu_custom_call.1} parent=1 // pred_fallthru
      _
    // Predicated region
    $region26: #{tpu_custom_call.1} parent=1 // pred_check
      _
    $region27: #{tpu_custom_call.1} parent=1 // pred_check_branch
      %57 = sbr.rel (0) target = $region29
    $region28: #{tpu_custom_call.1} parent=1 // pred_region
      %58 = dma.done [#allocation7], 4096
    $region29: #{tpu_custom_call.1} parent=1 // pred_fallthru
      _
    // Predicated region
    $region30: #{tpu_custom_call.1} parent=1 // pred_check
      _
    $region31: #{tpu_custom_call.1} parent=1 // pred_check_branch
      %60 = sbr.rel (0) target = $region33
    $region32: #{tpu_custom_call.1} parent=1 // pred_region
      %61 = dma.done [#allocation7], 4096
    $region33: #{tpu_custom_call.1} parent=1 // pred_fallthru
      _
    %p62 = scmp.eq.s32.totalorder 0, 0
    // Predicated region
    $region34: #{tpu_custom_call.1} parent=1 // pred_check
      %p63 = pneg %p62
    $region35: #{tpu_custom_call.1} parent=1 // pred_check_branch
      %65 = sbr.rel (%p63) target = $region37
    $region36: #{tpu_custom_call.1} parent=1 // pred_region
      %66 = vst [vmem:[#allocation2] sm:$0xff] 0.0
      %67 = vst [vmem:[#allocation2 + $0x8] sm:$0xff] 0.0
    $region37: #{tpu_custom_call.1} parent=1 // pred_fallthru
      _
    %v68 = vld [vmem:[#allocation3] sm:$0xff]
    %v69 = vld [vmem:[#allocation3 + $0x8] sm:$0xff]
    %v70 = vld [vmem:[#allocation6] sm:$0xff]
    %v71 = vld [vmem:[#allocation6 + $0x8] sm:$0xff]
    %v72 = vld [vmem:[#allocation6 + $0x10] sm:$0xff]
    %v73 = vld [vmem:[#allocation6 + $0x18] sm:$0xff]
    %v74 = vld [vmem:[#allocation6 + $0x20] sm:$0xff]
    %v75 = vld [vmem:[#allocation6 + $0x28] sm:$0xff]
    %v76 = vld [vmem:[#allocation6 + $0x30] sm:$0xff]
    %v77 = vld [vmem:[#allocation6 + $0x38] sm:$0xff]
    %v78 = vld [vmem:[#allocation6 + $0x40] sm:$0xff]
    %v79 = vld [vmem:[#allocation6 + $0x48] sm:$0xff]
    %v80 = vld [vmem:[#allocation6 + $0x50] sm:$0xff]
    %v81 = vld [vmem:[#allocation6 + $0x58] sm:$0xff]
    %v82 = vld [vmem:[#allocation6 + $0x60] sm:$0xff]
    %v83 = vld [vmem:[#allocation6 + $0x68] sm:$0xff]
    %v84 = vld [vmem:[#allocation6 + $0x70] sm:$0xff]
    %v85 = vld [vmem:[#allocation6 + $0x78] sm:$0xff]
    %v86 = vld [vmem:[#allocation6 + $0x80] sm:$0xff]
    %v87 = vld [vmem:[#allocation6 + $0x88] sm:$0xff]
    %v88 = vld [vmem:[#allocation6 + $0x90] sm:$0xff]
    %v89 = vld [vmem:[#allocation6 + $0x98] sm:$0xff]
    %v90 = vld [vmem:[#allocation6 + $0xa0] sm:$0xff]
    %v91 = vld [vmem:[#allocation6 + $0xa8] sm:$0xff]
    %v92 = vld [vmem:[#allocation6 + $0xb0] sm:$0xff]
    %v93 = vld [vmem:[#allocation6 + $0xb8] sm:$0xff]
    %v94 = vld [vmem:[#allocation6 + $0xc0] sm:$0xff]
    %v95 = vld [vmem:[#allocation6 + $0xc8] sm:$0xff]
    %v96 = vld [vmem:[#allocation6 + $0xd0] sm:$0xff]
    %v97 = vld [vmem:[#allocation6 + $0xd8] sm:$0xff]
    %v98 = vld [vmem:[#allocation6 + $0xe0] sm:$0xff]
    %v99 = vld [vmem:[#allocation6 + $0xe8] sm:$0xff]
    %v100 = vld [vmem:[#allocation6 + $0xf0] sm:$0xff]
    %v101 = vld [vmem:[#allocation6 + $0xf8] sm:$0xff]
    %v102 = vld [vmem:[%s2] sm:$0x3]
    %v104 = vlaneseq
    %v105 = vshrl.u32 %v104, 7
    %v106 = vsub.s32 0, %v105
    %v107 = vrot.slane %v102, %v106
    %v108 = vlaneseq
    %v109 = vshrl.u32 %v108, 7
    %v110 = vsub.s32 1, %v109
    %v111 = vrot.slane %v102, %v110
    %114 = vmatprep.subr.mxu0 %v101
    %115 = vmatpush1.msra.mxu0 %v100
    %116 = vmatprep.subr.mxu0 %v99
    %117 = vmatpush1.msra.mxu0 %v98
    %118 = vmatprep.subr.mxu0 %v97
    %119 = vmatpush1.msra.mxu0 %v96
    %120 = vmatprep.subr.mxu0 %v95
    %121 = vmatpush1.msra.mxu0 %v94
    %122 = vmatprep.subr.mxu0 %v93
    %123 = vmatpush1.msra.mxu0 %v92
    %124 = vmatprep.subr.mxu0 %v91
    %125 = vmatpush1.msra.mxu0 %v90
    %126 = vmatprep.subr.mxu0 %v89
    %127 = vmatpush1.msra.mxu0 %v88
    %128 = vmatprep.subr.mxu0 %v87
    %129 = vmatpush1.msra.mxu0 %v86
    %130 = vmatprep.subr.mxu0 %v85
    %131 = vmatpush1.msra.mxu0 %v84
    %132 = vmatprep.subr.mxu0 %v83
    %133 = vmatpush1.msra.mxu0 %v82
    %134 = vmatprep.subr.mxu0 %v81
    %135 = vmatpush1.msra.mxu0 %v80
    %136 = vmatprep.subr.mxu0 %v79
    %137 = vmatpush1.msra.mxu0 %v78
    %138 = vmatprep.subr.mxu0 %v77
    %139 = vmatpush1.msra.mxu0 %v76
    %140 = vmatprep.subr.mxu0 %v75
    %141 = vmatpush1.msra.mxu0 %v74
    %142 = vmatprep.subr.mxu0 %v73
    %143 = vmatpush1.msra.mxu0 %v72
    %144 = vmatprep.subr.mxu0 %v71
    %145 = vmatpush1.msra.mxu0 %v70
    %146 = vmatprep.subr.mxu0 0.0
    %147 = vmatpush2.msra.mxu0 0.0
    %148 = vmatprep.subr.mxu0 0.0
    %149 = vmatpush2.msra.mxu0 0.0
    %150 = vmatprep.subr.mxu0 0.0
    %151 = vmatpush2.msra.mxu0 0.0
    %152 = vmatprep.subr.mxu0 0.0
    %153 = vmatpush2.msra.mxu0 0.0
    %154 = vmatprep.subr.mxu0 0.0
    %155 = vmatpush2.msra.mxu0 0.0
    %156 = vmatprep.subr.mxu0 0.0
    %157 = vmatpush2.msra.mxu0 0.0
    %158 = vmatprep.subr.mxu0 0.0
    %159 = vmatpush2.msra.mxu0 0.0
    %160 = vmatprep.subr.mxu0 0.0
    %161 = vmatpush2.msra.mxu0 0.0
    %162 = vmatprep.subr.mxu0 0.0
    %163 = vmatpush2.msra.mxu0 0.0
    %164 = vmatprep.subr.mxu0 0.0
    %165 = vmatpush2.msra.mxu0 0.0
    %166 = vmatprep.subr.mxu0 0.0
    %167 = vmatpush2.msra.mxu0 0.0
    %168 = vmatprep.subr.mxu0 0.0
    %169 = vmatpush2.msra.mxu0 0.0
    %170 = vmatprep.subr.mxu0 0.0
    %171 = vmatpush2.msra.mxu0 0.0
    %172 = vmatprep.subr.mxu0 0.0
    %173 = vmatpush2.msra.mxu0 0.0
    %174 = vmatprep.subr.mxu0 0.0
    %175 = vmatpush2.msra.mxu0 0.0
    %176 = vmatprep.subr.mxu0 0.0
    %177 = vmatpush2.msra.mxu0 0.0
    %178 = vmatprep.mubr.f32.mxu0 0.0
    %179 = vmatmul.mubr.f32.gmra.mxu0 %v68
    %v180 = vpop.f32.mrf.mxu0
    %v181 = vadd.f32 %v107, %v180
    %v182 = vpop.f32.mrf.mxu0
    %v183 = vadd.f32 %v111, %v182
    %184 = vmatprep.mubr.f32.mxu0 0.0
    %185 = vmatmul.mubr.f32.gmra.mxu0 %v69
    %v186 = vpop.f32.mrf.mxu0
    %v187 = vadd.f32 %v107, %v186
    %v188 = vpop.f32.mrf.mxu0
    %v189 = vadd.f32 %v111, %v188
    %190 = vdwg.mxu0
    %v191 = vmax.f32 %v181, 0.0
    %v192 = vmax.f32 %v183, 0.0
    %v193 = vmax.f32 %v187, 0.0
    %v194 = vmax.f32 %v189, 0.0
    %v195 = vld [vmem:[#allocation2] sm:$0xff]
    %v196 = vld [vmem:[#allocation2 + $0x8] sm:$0xff]
    %v197 = vld [vmem:[#allocation8] sm:$0xff]
    %v198 = vld [vmem:[#allocation8 + $0x8] sm:$0xff]
    %v199 = vld [vmem:[#allocation8 + $0x10] sm:$0xff]
    %v200 = vld [vmem:[#allocation8 + $0x18] sm:$0xff]
    %v201 = vld [vmem:[#allocation8 + $0x20] sm:$0xff]
    %v202 = vld [vmem:[#allocation8 + $0x28] sm:$0xff]
    %v203 = vld [vmem:[#allocation8 + $0x30] sm:$0xff]
    %v204 = vld [vmem:[#allocation8 + $0x38] sm:$0xff]
    %v205 = vld [vmem:[#allocation8 + $0x40] sm:$0xff]
    %v206 = vld [vmem:[#allocation8 + $0x48] sm:$0xff]
    %v207 = vld [vmem:[#allocation8 + $0x50] sm:$0xff]
    %v208 = vld [vmem:[#allocation8 + $0x58] sm:$0xff]
    %v209 = vld [vmem:[#allocation8 + $0x60] sm:$0xff]
    %v210 = vld [vmem:[#allocation8 + $0x68] sm:$0xff]
    %v211 = vld [vmem:[#allocation8 + $0x70] sm:$0xff]
    %v212 = vld [vmem:[#allocation8 + $0x78] sm:$0xff]
    %v213 = vld [vmem:[#allocation8 + $0x80] sm:$0xff]
    %v214 = vld [vmem:[#allocation8 + $0x88] sm:$0xff]
    %v215 = vld [vmem:[#allocation8 + $0x90] sm:$0xff]
    %v216 = vld [vmem:[#allocation8 + $0x98] sm:$0xff]
    %v217 = vld [vmem:[#allocation8 + $0xa0] sm:$0xff]
    %v218 = vld [vmem:[#allocation8 + $0xa8] sm:$0xff]
    %v219 = vld [vmem:[#allocation8 + $0xb0] sm:$0xff]
    %v220 = vld [vmem:[#allocation8 + $0xb8] sm:$0xff]
    %v221 = vld [vmem:[#allocation8 + $0xc0] sm:$0xff]
    %v222 = vld [vmem:[#allocation8 + $0xc8] sm:$0xff]
    %v223 = vld [vmem:[#allocation8 + $0xd0] sm:$0xff]
    %v224 = vld [vmem:[#allocation8 + $0xd8] sm:$0xff]
    %v225 = vld [vmem:[#allocation8 + $0xe0] sm:$0xff]
    %v226 = vld [vmem:[#allocation8 + $0xe8] sm:$0xff]
    %v227 = vld [vmem:[#allocation8 + $0xf0] sm:$0xff]
    %v228 = vld [vmem:[#allocation8 + $0xf8] sm:$0xff]
    %229 = vmatprep.subr.mxu0 0.0
    %230 = vmatpush1.msra.mxu0 %v212
    %231 = vmatprep.subr.mxu0 0.0
    %232 = vmatpush1.msra.mxu0 %v211
    %233 = vmatprep.subr.mxu0 0.0
    %234 = vmatpush1.msra.mxu0 %v210
    %235 = vmatprep.subr.mxu0 0.0
    %236 = vmatpush1.msra.mxu0 %v209
    %237 = vmatprep.subr.mxu0 0.0
    %238 = vmatpush1.msra.mxu0 %v208
    %239 = vmatprep.subr.mxu0 0.0
    %240 = vmatpush1.msra.mxu0 %v207
    %241 = vmatprep.subr.mxu0 0.0
    %242 = vmatpush1.msra.mxu0 %v206
    %243 = vmatprep.subr.mxu0 0.0
    %244 = vmatpush1.msra.mxu0 %v205
    %245 = vmatprep.subr.mxu0 0.0
    %246 = vmatpush1.msra.mxu0 %v204
    %247 = vmatprep.subr.mxu0 0.0
    %248 = vmatpush1.msra.mxu0 %v203
    %249 = vmatprep.subr.mxu0 0.0
    %250 = vmatpush1.msra.mxu0 %v202
    %251 = vmatprep.subr.mxu0 0.0
    %252 = vmatpush1.msra.mxu0 %v201
    %253 = vmatprep.subr.mxu0 0.0
    %254 = vmatpush1.msra.mxu0 %v200
    %255 = vmatprep.subr.mxu0 0.0
    %256 = vmatpush1.msra.mxu0 %v199
    %257 = vmatprep.subr.mxu0 0.0
    %258 = vmatpush1.msra.mxu0 %v198
    %259 = vmatprep.subr.mxu0 0.0
    %260 = vmatpush1.msra.mxu0 %v197
    %261 = vmatprep.subr.mxu0 0.0
    %262 = vmatpush2.msra.mxu0 %v228
    %263 = vmatprep.subr.mxu0 0.0
    %264 = vmatpush2.msra.mxu0 %v227
    %265 = vmatprep.subr.mxu0 0.0
    %266 = vmatpush2.msra.mxu0 %v226
    %267 = vmatprep.subr.mxu0 0.0
    %268 = vmatpush2.msra.mxu0 %v225
    %269 = vmatprep.subr.mxu0 0.0
    %270 = vmatpush2.msra.mxu0 %v224
    %271 = vmatprep.subr.mxu0 0.0
    %272 = vmatpush2.msra.mxu0 %v223
    %273 = vmatprep.subr.mxu0 0.0
    %274 = vmatpush2.msra.mxu0 %v222
    %275 = vmatprep.subr.mxu0 0.0
    %276 = vmatpush2.msra.mxu0 %v221
    %277 = vmatprep.subr.mxu0 0.0
    %278 = vmatpush2.msra.mxu0 %v220
    %279 = vmatprep.subr.mxu0 0.0
    %280 = vmatpush2.msra.mxu0 %v219
    %281 = vmatprep.subr.mxu0 0.0
    %282 = vmatpush2.msra.mxu0 %v218
    %283 = vmatprep.subr.mxu0 0.0
    %284 = vmatpush2.msra.mxu0 %v217
    %285 = vmatprep.subr.mxu0 0.0
    %286 = vmatpush2.msra.mxu0 %v216
    %287 = vmatprep.subr.mxu0 0.0
    %288 = vmatpush2.msra.mxu0 %v215
    %289 = vmatprep.subr.mxu0 0.0
    %290 = vmatpush2.msra.mxu0 %v214
    %291 = vmatprep.subr.mxu0 0.0
    %292 = vmatpush2.msra.mxu0 %v213
    %293 = vmatprep.mubr.f32.mxu0 %v192
    %294 = vmatmul.mubr.f32.gmra.mxu0 %v191
    %v295 = vpop.f32.mrf.mxu0
    %v296 = vadd.f32 0.0, %v295
    %v297 = vpop.f32.mrf.mxu0
    %298 = vmatprep.mubr.f32.mxu0 %v194
    %299 = vmatmul.mubr.f32.gmra.mxu0 %v193
    %v300 = vpop.f32.mrf.mxu0
    %v301 = vadd.f32 0.0, %v300
    %v302 = vpop.f32.mrf.mxu0
    %303 = vdwg.mxu0
    %v304 = vadd.f32 %v195, %v296
    %v305 = vadd.f32 %v196, %v301
    %306 = vst [vmem:[#allocation2] sm:$0xff] %v304
    %307 = vst [vmem:[#allocation2 + $0x8] sm:$0xff] %v305
    // Predicated region
    $region38: #{tpu_custom_call.1} parent=1 // pred_check
      %p308 = pneg %p62
    $region39: #{tpu_custom_call.1} parent=1 // pred_check_branch
      %310 = sbr.rel (%p308) target = $region41
    $region40: #{tpu_custom_call.1} parent=1 // pred_region
      %v311 = vld [vmem:[#allocation2] sm:$0xff]
      %v312 = vld [vmem:[#allocation2 + $0x8] sm:$0xff]
      %v313 = vld [vmem:[%s4] sm:$0x1]
      %v315 = vlaneseq
      %v316 = vshrl.u32 %v315, 7
      %v317 = vsub.s32 0, %v316
      %v318 = vrot.slane %v313, %v317
      %v320 = vadd.f32 %v311, %v318
      %v321 = vadd.f32 %v312, %v318
      %v322 = vadd.f32 %v320, %v68
      %v323 = vadd.f32 %v321, %v69
      %324 = vst [vmem:[#allocation9] sm:$0xff] %v322
      %325 = vst [vmem:[#allocation9 + $0x8] sm:$0xff] %v323
    $region41: #{tpu_custom_call.1} parent=1 // pred_fallthru
      _
    // Predicated region
    $region42: #{tpu_custom_call.1} parent=1 // pred_check
      _
    $region43: #{tpu_custom_call.1} parent=1 // pred_check_branch
      %327 = sbr.rel (0) target = $region45
    $region44: #{tpu_custom_call.1} parent=1 // pred_region
      %s329 = ssub.s32 256, 256
      %330 = vsyncadd [#allocation5], %s329
      %s331 = sshll.u32 [#allocation9], 4
      %s332 = int_to_ptr.vmem [resolvable:$true] %s331
      %337 = dma.vmem_to_hbm [thread:$0]  %s332, 256, %s5, [#allocation5], 128, 128, 8
    $region45: #{tpu_custom_call.1} parent=1 // pred_fallthru
      _
    // Predicated region
    $region46: #{tpu_custom_call.1} parent=1 // pred_check
      _
    $region47: #{tpu_custom_call.1} parent=1 // pred_check_branch
      %339 = sbr.rel (0) target = $region49
    $region48: #{tpu_custom_call.1} parent=1 // pred_region
      %340 = dma.done [#allocation5], 256
    $region49: #{tpu_custom_call.1} parent=1 // pred_fallthru
      _
    %341 = vsyncpa [#allocation4], 1
    %342 = vsyncpa [#allocation7], 1
    %343 = vsyncpa [#allocation5], 1

// kernel: tpu_custom_call.1
$region0: #{tpu_custom_call.1}
  #allocation0 [shape = 'u32[]', space=smem, size = 0x4, offset = 0x4, fixed_abs, tag = 'smem constant byte address 0x4 - core index']
  #allocation1 [shape = 'u32[144,128]{1,0:T(1,128)}', space=vmem, size = 0x12000, scoped, tag = 'internal scratch']
  #allocation2 [shape = 'f32[16,128]{1,0:T(8,128)}', space=vmem, size = 0x2000, scoped, tag = 'scratch operand']
  %s0 = inlined_call_operand.hbm [shape: f32[16,128], index: 0, kind: input, shape index: {}]
  %s1 = inlined_call_operand.hbm [shape: f32[128,256], index: 1, kind: input, shape index: {}]
  %s2 = inlined_call_operand.vmem [shape: f32[1,256], index: 2, kind: input, shape index: {}]
  %s3 = inlined_call_operand.hbm [shape: f32[256,128], index: 3, kind: input, shape index: {}]
  %s4 = inlined_call_operand.vmem [shape: f32[1,128], index: 4, kind: input, shape index: {}]
  %s5 = inlined_call_operand.hbm [shape: f32[16,128], index: 5, kind: output, shape index: {}]
  %s6 = sld [smem:[#allocation0]]
  $region50: #{tpu_custom_call.1} parent=0
    _
  %s8 = ssub.s32 1, %s6
  %s9 = scalar_select 0, %s8, %s6
  $region1: #{tpu_custom_call.1} parent=0
    #allocation3 [shape = 'u8[8192]{0}', space=vmem, size = 0x2000, scoped, tag = 'input window, operand 0, single buffered']
    #allocation4 [shape = 's32[1]{0}', space=sflag, size = 0x4, scoped, tag = 'scoped memory for tpu_custom_call.1']
    #allocation5 [shape = 's32[1]{0}', space=sflag, size = 0x4, scoped, tag = 'scoped memory for tpu_custom_call.1']
    #allocation6 [shape = 'u8[131072]{0}', space=vmem, size = 0x20000, scoped, tag = 'input window, operand 1, single buffered']
    #allocation7 [shape = 's32[1]{0}', space=sflag, size = 0x4, scoped, tag = 'scoped memory for tpu_custom_call.1']
    #allocation8 [shape = 'u8[131072]{0}', space=vmem, size = 0x20000, scoped, tag = 'input window, operand 3, single buffered']
    #allocation9 [shape = 'u8[8192]{0}', space=vmem, size = 0x2000, scoped, tag = 'output window, operand 0, single buffered']
    %10 = vsyncpa [#allocation4], 0
    %11 = vsyncpa [#allocation7], 0
    %12 = vsyncpa [#allocation5], 0
    // Predicated region
    $region2: #{tpu_custom_call.1} parent=1 // pred_check
      _
    $region3: #{tpu_custom_call.1} parent=1 // pred_check_branch
      %14 = sbr.rel (0) target = $region5
    $region4: #{tpu_custom_call.1} parent=1 // pred_region
      %s16 = ssub.s32 256, 256
      %17 = vsyncadd [#allocation4], %s16
      %s18 = sshll.u32 [#allocation3], 4
      %s19 = int_to_ptr.vmem [resolvable:$true] %s18
      %24 = dma.hbm_to_vmem [thread:$0]  %s0, 256, %s19, [#allocation4], 128, 128, 8
    $region5: #{tpu_custom_call.1} parent=1 // pred_fallthru
      _
    // Predicated region
    $region6: #{tpu_custom_call.1} parent=1 // pred_check
      _
    $region7: #{tpu_custom_call.1} parent=1 // pred_check_branch
      %26 = sbr.rel (0) target = $region9
    $region8: #{tpu_custom_call.1} parent=1 // pred_region
      %s28 = ssub.s32 4096, 4096
      %29 = vsyncadd [#allocation7], %s28
      %s30 = sshll.u32 [#allocation6], 4
      %s31 = int_to_ptr.vmem [resolvable:$true] %s30
      %36 = dma.hbm_to_vmem [thread:$0]  %s1, 4096, %s31, [#allocation7], 256, 256, 16
    $region9: #{tpu_custom_call.1} parent=1 // pred_fallthru
      _
    // Predicated region
    $region10: #{tpu_custom_call.1} parent=1 // pred_check
      _
    $region11: #{tpu_custom_call.1} parent=1 // pred_check_branch
      %38 = sbr.rel (0) target = $region13
    $region12: #{tpu_custom_call.1} parent=1 // pred_region
      _
    $region13: #{tpu_custom_call.1} parent=1 // pred_fallthru
      _
    // Predicated region
    $region14: #{tpu_custom_call.1} parent=1 // pred_check
      _
    $region15: #{tpu_custom_call.1} parent=1 // pred_check_branch
      %40 = sbr.rel (0) target = $region17
    $region16: #{tpu_custom_call.1} parent=1 // pred_region
      %s42 = ssub.s32 4096, 4096
      %43 = vsyncadd [#allocation7], %s42
      %s44 = sshll.u32 [#allocation8], 4
      %s45 = int_to_ptr.vmem [resolvable:$true] %s44
      %50 = dma.hbm_to_vmem [thread:$0]  %s3, 4096, %s45, [#allocation7], 128, 128, 8
    $region17: #{tpu_custom_call.1} parent=1 // pred_fallthru
      _
    // Predicated region
    $region18: #{tpu_custom_call.1} parent=1 // pred_check
      _
    $region19: #{tpu_custom_call.1} parent=1 // pred_check_branch
      %52 = sbr.rel (0) target = $region21
    $region20: #{tpu_custom_call.1} parent=1 // pred_region
      _
    $region21: #{tpu_custom_call.1} parent=1 // pred_fallthru
      _
    // Predicated region
    $region22: #{tpu_custom_call.1} parent=1 // pred_check
      _
    $region23: #{tpu_custom_call.1} parent=1 // pred_check_branch
      %54 = sbr.rel (0) target = $region25
    $region24: #{tpu_custom_call.1} parent=1 // pred_region
      %55 = dma.done [#allocation4], 256
    $region25: #{tpu_custom_call.1} parent=1 // pred_fallthru
      _
    // Predicated region
    $region26: #{tpu_custom_call.1} parent=1 // pred_check
      _
    $region27: #{tpu_custom_call.1} parent=1 // pred_check_branch
      %57 = sbr.rel (0) target = $region29
    $region28: #{tpu_custom_call.1} parent=1 // pred_region
      %58 = dma.done [#allocation7], 4096
    $region29: #{tpu_custom_call.1} parent=1 // pred_fallthru
      _
    // Predicated region
    $region30: #{tpu_custom_call.1} parent=1 // pred_check
      _
    $region31: #{tpu_custom_call.1} parent=1 // pred_check_branch
      %60 = sbr.rel (0) target = $region33
    $region32: #{tpu_custom_call.1} parent=1 // pred_region
      %61 = dma.done [#allocation7], 4096
    $region33: #{tpu_custom_call.1} parent=1 // pred_fallthru
      _
    %p62 = scmp.eq.s32.totalorder 0, 0
    // Predicated region
    $region34: #{tpu_custom_call.1} parent=1 // pred_check
      %p63 = pneg %p62
    $region35: #{tpu_custom_call.1} parent=1 // pred_check_branch
      %65 = sbr.rel (%p63) target = $region37
    $region36: #{tpu_custom_call.1} parent=1 // pred_region
      %66 = vst [vmem:[#allocation2] sm:$0xff] 0.0
      %67 = vst [vmem:[#allocation2 + $0x8] sm:$0xff] 0.0
    $region37: #{tpu_custom_call.1} parent=1 // pred_fallthru
      _
    %v68 = vld [vmem:[#allocation3] sm:$0xff]
    %v69 = vld [vmem:[#allocation3 + $0x8] sm:$0xff]
    %v70 = vld [vmem:[#allocation6] sm:$0xff]
    %v71 = vld [vmem:[#allocation6 + $0x8] sm:$0xff]
    %v72 = vld [vmem:[#allocation6 + $0x10] sm:$0xff]
    %v73 = vld [vmem:[#allocation6 + $0x18] sm:$0xff]
    %v74 = vld [vmem:[#allocation6 + $0x20] sm:$0xff]
    %v75 = vld [vmem:[#allocation6 + $0x28] sm:$0xff]
    %v76 = vld [vmem:[#allocation6 + $0x30] sm:$0xff]
    %v77 = vld [vmem:[#allocation6 + $0x38] sm:$0xff]
    %v78 = vld [vmem:[#allocation6 + $0x40] sm:$0xff]
    %v79 = vld [vmem:[#allocation6 + $0x48] sm:$0xff]
    %v80 = vld [vmem:[#allocation6 + $0x50] sm:$0xff]
    %v81 = vld [vmem:[#allocation6 + $0x58] sm:$0xff]
    %v82 = vld [vmem:[#allocation6 + $0x60] sm:$0xff]
    %v83 = vld [vmem:[#allocation6 + $0x68] sm:$0xff]
    %v84 = vld [vmem:[#allocation6 + $0x70] sm:$0xff]
    %v85 = vld [vmem:[#allocation6 + $0x78] sm:$0xff]
    %v86 = vld [vmem:[#allocation6 + $0x80] sm:$0xff]
    %v87 = vld [vmem:[#allocation6 + $0x88] sm:$0xff]
    %v88 = vld [vmem:[#allocation6 + $0x90] sm:$0xff]
    %v89 = vld [vmem:[#allocation6 + $0x98] sm:$0xff]
    %v90 = vld [vmem:[#allocation6 + $0xa0] sm:$0xff]
    %v91 = vld [vmem:[#allocation6 + $0xa8] sm:$0xff]
    %v92 = vld [vmem:[#allocation6 + $0xb0] sm:$0xff]
    %v93 = vld [vmem:[#allocation6 + $0xb8] sm:$0xff]
    %v94 = vld [vmem:[#allocation6 + $0xc0] sm:$0xff]
    %v95 = vld [vmem:[#allocation6 + $0xc8] sm:$0xff]
    %v96 = vld [vmem:[#allocation6 + $0xd0] sm:$0xff]
    %v97 = vld [vmem:[#allocation6 + $0xd8] sm:$0xff]
    %v98 = vld [vmem:[#allocation6 + $0xe0] sm:$0xff]
    %v99 = vld [vmem:[#allocation6 + $0xe8] sm:$0xff]
    %v100 = vld [vmem:[#allocation6 + $0xf0] sm:$0xff]
    %v101 = vld [vmem:[#allocation6 + $0xf8] sm:$0xff]
    %v102 = vld [vmem:[%s2] sm:$0x3]
    %v104 = vlaneseq
    %v105 = vshrl.u32 %v104, 7
    %v106 = vsub.s32 0, %v105
    %v107 = vrot.slane %v102, %v106
    %v108 = vlaneseq
    %v109 = vshrl.u32 %v108, 7
    %v110 = vsub.s32 1, %v109
    %v111 = vrot.slane %v102, %v110
    %114 = vmatprep.subr.mxu0 %v101
    %115 = vmatpush1.msra.mxu0 %v100
    %116 = vmatprep.subr.mxu0 %v99
    %117 = vmatpush1.msra.mxu0 %v98
    %118 = vmatprep.subr.mxu0 %v97
    %119 = vmatpush1.msra.mxu0 %v96
    %120 = vmatprep.subr.mxu0 %v95
    %121 = vmatpush1.msra.mxu0 %v94
    %122 = vmatprep.subr.mxu0 %v93
    %123 = vmatpush1.msra.mxu0 %v92
    %124 = vmatprep.subr.mxu0 %v91
    %125 = vmatpush1.msra.mxu0 %v90
    %126 = vmatprep.subr.mxu0 %v89
    %127 = vmatpush1.msra.mxu0 %v88
    %128 = vmatprep.subr.mxu0 %v87
    %129 = vmatpush1.msra.mxu0 %v86
    %130 = vmatprep.subr.mxu0 %v85
    %131 = vmatpush1.msra.mxu0 %v84
    %132 = vmatprep.subr.mxu0 %v83
    %133 = vmatpush1.msra.mxu0 %v82
    %134 = vmatprep.subr.mxu0 %v81
    %135 = vmatpush1.msra.mxu0 %v80
    %136 = vmatprep.subr.mxu0 %v79
    %137 = vmatpush1.msra.mxu0 %v78
    %138 = vmatprep.subr.mxu0 %v77
    %139 = vmatpush1.msra.mxu0 %v76
    %140 = vmatprep.subr.mxu0 %v75
    %141 = vmatpush1.msra.mxu0 %v74
    %142 = vmatprep.subr.mxu0 %v73
    %143 = vmatpush1.msra.mxu0 %v72
    %144 = vmatprep.subr.mxu0 %v71
    %145 = vmatpush1.msra.mxu0 %v70
    %146 = vmatprep.subr.mxu0 0.0
    %147 = vmatpush2.msra.mxu0 0.0
    %148 = vmatprep.subr.mxu0 0.0
    %149 = vmatpush2.msra.mxu0 0.0
    %150 = vmatprep.subr.mxu0 0.0
    %151 = vmatpush2.msra.mxu0 0.0
    %152 = vmatprep.subr.mxu0 0.0
    %153 = vmatpush2.msra.mxu0 0.0
    %154 = vmatprep.subr.mxu0 0.0
    %155 = vmatpush2.msra.mxu0 0.0
    %156 = vmatprep.subr.mxu0 0.0
    %157 = vmatpush2.msra.mxu0 0.0
    %158 = vmatprep.subr.mxu0 0.0
    %159 = vmatpush2.msra.mxu0 0.0
    %160 = vmatprep.subr.mxu0 0.0
    %161 = vmatpush2.msra.mxu0 0.0
    %162 = vmatprep.subr.mxu0 0.0
    %163 = vmatpush2.msra.mxu0 0.0
    %164 = vmatprep.subr.mxu0 0.0
    %165 = vmatpush2.msra.mxu0 0.0
    %166 = vmatprep.subr.mxu0 0.0
    %167 = vmatpush2.msra.mxu0 0.0
    %168 = vmatprep.subr.mxu0 0.0
    %169 = vmatpush2.msra.mxu0 0.0
    %170 = vmatprep.subr.mxu0 0.0
    %171 = vmatpush2.msra.mxu0 0.0
    %172 = vmatprep.subr.mxu0 0.0
    %173 = vmatpush2.msra.mxu0 0.0
    %174 = vmatprep.subr.mxu0 0.0
    %175 = vmatpush2.msra.mxu0 0.0
    %176 = vmatprep.subr.mxu0 0.0
    %177 = vmatpush2.msra.mxu0 0.0
    %178 = vmatprep.mubr.f32.mxu0 0.0
    %179 = vmatmul.mubr.f32.gmra.mxu0 %v68
    %v180 = vpop.f32.mrf.mxu0
    %v181 = vadd.f32 %v107, %v180
    %v182 = vpop.f32.mrf.mxu0
    %v183 = vadd.f32 %v111, %v182
    %184 = vmatprep.mubr.f32.mxu0 0.0
    %185 = vmatmul.mubr.f32.gmra.mxu0 %v69
    %v186 = vpop.f32.mrf.mxu0
    %v187 = vadd.f32 %v107, %v186
    %v188 = vpop.f32.mrf.mxu0
    %v189 = vadd.f32 %v111, %v188
    %190 = vdwg.mxu0
    %v191 = vmax.f32 %v181, 0.0
    %v192 = vmax.f32 %v183, 0.0
    %v193 = vmax.f32 %v187, 0.0
    %v194 = vmax.f32 %v189, 0.0
    %v195 = vld [vmem:[#allocation2] sm:$0xff]
    %v196 = vld [vmem:[#allocation2 + $0x8] sm:$0xff]
    %v197 = vld [vmem:[#allocation8] sm:$0xff]
    %v198 = vld [vmem:[#allocation8 + $0x8] sm:$0xff]
    %v199 = vld [vmem:[#allocation8 + $0x10] sm:$0xff]
    %v200 = vld [vmem:[#allocation8 + $0x18] sm:$0xff]
    %v201 = vld [vmem:[#allocation8 + $0x20] sm:$0xff]
    %v202 = vld [vmem:[#allocation8 + $0x28] sm:$0xff]
    %v203 = vld [vmem:[#allocation8 + $0x30] sm:$0xff]
    %v204 = vld [vmem:[#allocation8 + $0x38] sm:$0xff]
    %v205 = vld [vmem:[#allocation8 + $0x40] sm:$0xff]
    %v206 = vld [vmem:[#allocation8 + $0x48] sm:$0xff]
    %v207 = vld [vmem:[#allocation8 + $0x50] sm:$0xff]
    %v208 = vld [vmem:[#allocation8 + $0x58] sm:$0xff]
    %v209 = vld [vmem:[#allocation8 + $0x60] sm:$0xff]
    %v210 = vld [vmem:[#allocation8 + $0x68] sm:$0xff]
    %v211 = vld [vmem:[#allocation8 + $0x70] sm:$0xff]
    %v212 = vld [vmem:[#allocation8 + $0x78] sm:$0xff]
    %v213 = vld [vmem:[#allocation8 + $0x80] sm:$0xff]
    %v214 = vld [vmem:[#allocation8 + $0x88] sm:$0xff]
    %v215 = vld [vmem:[#allocation8 + $0x90] sm:$0xff]
    %v216 = vld [vmem:[#allocation8 + $0x98] sm:$0xff]
    %v217 = vld [vmem:[#allocation8 + $0xa0] sm:$0xff]
    %v218 = vld [vmem:[#allocation8 + $0xa8] sm:$0xff]
    %v219 = vld [vmem:[#allocation8 + $0xb0] sm:$0xff]
    %v220 = vld [vmem:[#allocation8 + $0xb8] sm:$0xff]
    %v221 = vld [vmem:[#allocation8 + $0xc0] sm:$0xff]
    %v222 = vld [vmem:[#allocation8 + $0xc8] sm:$0xff]
    %v223 = vld [vmem:[#allocation8 + $0xd0] sm:$0xff]
    %v224 = vld [vmem:[#allocation8 + $0xd8] sm:$0xff]
    %v225 = vld [vmem:[#allocation8 + $0xe0] sm:$0xff]
    %v226 = vld [vmem:[#allocation8 + $0xe8] sm:$0xff]
    %v227 = vld [vmem:[#allocation8 + $0xf0] sm:$0xff]
    %v228 = vld [vmem:[#allocation8 + $0xf8] sm:$0xff]
    %229 = vmatprep.subr.mxu0 0.0
    %230 = vmatpush1.msra.mxu0 %v212
    %231 = vmatprep.subr.mxu0 0.0
    %232 = vmatpush1.msra.mxu0 %v211
    %233 = vmatprep.subr.mxu0 0.0
    %234 = vmatpush1.msra.mxu0 %v210
    %235 = vmatprep.subr.mxu0 0.0
    %236 = vmatpush1.msra.mxu0 %v209
    %237 = vmatprep.subr.mxu0 0.0
    %238 = vmatpush1.msra.mxu0 %v208
    %239 = vmatprep.subr.mxu0 0.0
    %240 = vmatpush1.msra.mxu0 %v207
    %241 = vmatprep.subr.mxu0 0.0
    %242 = vmatpush1.msra.mxu0 %v206
    %243 = vmatprep.subr.mxu0 0.0
    %244 = vmatpush1.msra.mxu0 %v205
    %245 = vmatprep.subr.mxu0 0.0
    %246 = vmatpush1.msra.mxu0 %v204
    %247 = vmatprep.subr.mxu0 0.0
    %248 = vmatpush1.msra.mxu0 %v203
    %249 = vmatprep.subr.mxu0 0.0
    %250 = vmatpush1.msra.mxu0 %v202
    %251 = vmatprep.subr.mxu0 0.0
    %252 = vmatpush1.msra.mxu0 %v201
    %253 = vmatprep.subr.mxu0 0.0
    %254 = vmatpush1.msra.mxu0 %v200
    %255 = vmatprep.subr.mxu0 0.0
    %256 = vmatpush1.msra.mxu0 %v199
    %257 = vmatprep.subr.mxu0 0.0
    %258 = vmatpush1.msra.mxu0 %v198
    %259 = vmatprep.subr.mxu0 0.0
    %260 = vmatpush1.msra.mxu0 %v197
    %261 = vmatprep.subr.mxu0 0.0
    %262 = vmatpush2.msra.mxu0 %v228
    %263 = vmatprep.subr.mxu0 0.0
    %264 = vmatpush2.msra.mxu0 %v227
    %265 = vmatprep.subr.mxu0 0.0
    %266 = vmatpush2.msra.mxu0 %v226
    %267 = vmatprep.subr.mxu0 0.0
    %268 = vmatpush2.msra.mxu0 %v225
    %269 = vmatprep.subr.mxu0 0.0
    %270 = vmatpush2.msra.mxu0 %v224
    %271 = vmatprep.subr.mxu0 0.0
    %272 = vmatpush2.msra.mxu0 %v223
    %273 = vmatprep.subr.mxu0 0.0
    %274 = vmatpush2.msra.mxu0 %v222
    %275 = vmatprep.subr.mxu0 0.0
    %276 = vmatpush2.msra.mxu0 %v221
    %277 = vmatprep.subr.mxu0 0.0
    %278 = vmatpush2.msra.mxu0 %v220
    %279 = vmatprep.subr.mxu0 0.0
    %280 = vmatpush2.msra.mxu0 %v219
    %281 = vmatprep.subr.mxu0 0.0
    %282 = vmatpush2.msra.mxu0 %v218
    %283 = vmatprep.subr.mxu0 0.0
    %284 = vmatpush2.msra.mxu0 %v217
    %285 = vmatprep.subr.mxu0 0.0
    %286 = vmatpush2.msra.mxu0 %v216
    %287 = vmatprep.subr.mxu0 0.0
    %288 = vmatpush2.msra.mxu0 %v215
    %289 = vmatprep.subr.mxu0 0.0
    %290 = vmatpush2.msra.mxu0 %v214
    %291 = vmatprep.subr.mxu0 0.0
    %292 = vmatpush2.msra.mxu0 %v213
    %293 = vmatprep.mubr.f32.mxu0 %v192
    %294 = vmatmul.mubr.f32.gmra.mxu0 %v191
    %v295 = vpop.f32.mrf.mxu0
    %v296 = vadd.f32 0.0, %v295
    %v297 = vpop.f32.mrf.mxu0
    %298 = vmatprep.mubr.f32.mxu0 %v194
    %299 = vmatmul.mubr.f32.gmra.mxu0 %v193
    %v300 = vpop.f32.mrf.mxu0
    %v301 = vadd.f32 0.0, %v300
    %v302 = vpop.f32.mrf.mxu0
    %303 = vdwg.mxu0
    %v304 = vadd.f32 %v195, %v296
    %v305 = vadd.f32 %v196, %v301
    %306 = vst [vmem:[#allocation2] sm:$0xff] %v304
    %307 = vst [vmem:[#allocation2 + $0x8] sm:$0xff] %v305
    // Predicated region
    $region38: #{tpu_custom_call.1} parent=1 // pred_check
      %p308 = pneg %p62
    $region39: #{tpu_custom_call.1} parent=1 // pred_check_branch
      %310 = sbr.rel (%p308) target = $region41
    $region40: #{tpu_custom_call.1} parent=1 // pred_region
      %v311 = vld [vmem:[#allocation2] sm:$0xff]
      %v312 = vld [vmem:[#allocation2 + $0x8] sm:$0xff]
      %v313 = vld [vmem:[%s4] sm:$0x1]
      %v315 = vlaneseq
      %v316 = vshrl.u32 %v315, 7
      %v317 = vsub.s32 0, %v316
      %v318 = vrot.slane %v313, %v317
      %v320 = vadd.f32 %v311, %v318
      %v321 = vadd.f32 %v312, %v318
      %v322 = vadd.f32 %v320, %v68
      %v323 = vadd.f32 %v321, %v69
      %324 = vst [vmem:[#allocation9] sm:$0xff] %v322
      %325 = vst [vmem:[#allocation9 + $0x8] sm:$0xff] %v323
    $region41: #{tpu_custom_call.1} parent=1 // pred_fallthru
      _
    // Predicated region
    $region42: #{tpu_custom_call.1} parent=1 // pred_check
      _
    $region43: #{tpu_custom_call.1} parent=1 // pred_check_branch
      %327 = sbr.rel (0) target = $region45
    $region44: #{tpu_custom_call.1} parent=1 // pred_region
      %s329 = ssub.s32 256, 256
      %330 = vsyncadd [#allocation5], %s329
      %s331 = sshll.u32 [#allocation9], 4
      %s332 = int_to_ptr.vmem [resolvable:$true] %s331
      %337 = dma.vmem_to_hbm [thread:$0]  %s332, 256, %s5, [#allocation5], 128, 128, 8
    $region45: #{tpu_custom_call.1} parent=1 // pred_fallthru
      _
    // Predicated region
    $region46: #{tpu_custom_call.1} parent=1 // pred_check
      _
    $region47: #{tpu_custom_call.1} parent=1 // pred_check_branch
      %339 = sbr.rel (0) target = $region49
    $region48: #{tpu_custom_call.1} parent=1 // pred_region
      %340 = dma.done [#allocation5], 256
    $region49: #{tpu_custom_call.1} parent=1 // pred_fallthru
      _
    %341 = vsyncpa [#allocation4], 1
    %342 = vsyncpa [#allocation7], 1
    %343 = vsyncpa [#allocation5], 1

</llo_original>
